<compile_context>
chip_gen: v6e
topology: v6e:2x2x1
jax: 0.10.0
libtpu: 0.0.40
codegen_flags: <defaults>
</compile_context>

<pallas_src>
import functools

import jax
import jax.numpy as jnp
from jax.experimental import pallas as pl
from jax.experimental.pallas import tpu as pltpu


def _zero_kernel(x_ref, o_ref):
    # Elementwise multiply by 0.0: preserves NaN/Inf -> NaN and signed zeros,
    # exactly like torch.mul(0.0).  Single load -> vmul -> single store.
    o_ref[...] = x_ref[...] * jnp.array(0.0, dtype=o_ref.dtype)


def _packed_rows(itemsize: int) -> int:
    # Native packed sublane count: (8,128) for 32-bit, (16,128) for 16-bit,
    # (32,128) for 8-bit dtypes.
    if itemsize >= 4:
        return 8
    return 8 * (4 // itemsize)


def _default_block_bytes() -> int:
    # v7x HBM (~3.2 TB/s per TC) makes a 2 MiB step overhead-dominated; use
    # 4 MiB tiles there.  2 MiB already puts per-step overhead <5% on v5e/v6e.
    try:
        kind = jax.devices()[0].device_kind.lower()
    except Exception:
        return 2 * 1024 * 1024
    if "7" in kind:
        return 4 * 1024 * 1024
    return 2 * 1024 * 1024


def _pick_lanes(total: int, lane_cap: int, min_rows: int):
    """Widest lane width (multiple of 128 dividing `total`) keeping rows usable."""
    best, best_key = None, None
    for cand in range(128, min(total, lane_cap) + 1, 128):
        if total % cand:
            continue
        r = total // cand
        key = (
            (r % min_rows == 0) and (r >= 2 * min_rows),  # full vregs AND >=2 grid blocks possible
            r % min_rows == 0,                            # full packed vregs (unmasked vst)
            r >= min_rows,                                # at least one full sublane stack
            cand,                                         # then widest (lane-dense stores)
        )
        if best_key is None or key > best_key:
            best, best_key = cand, key
    return best


def _pick_tile_rows(rows, lanes, itemsize, min_rows, block_bytes):
    if rows <= min_rows:
        return rows
    budget = max(min_rows, (block_bytes // (lanes * itemsize)) // min_rows * min_rows)
    # Aim for >= 4 grid steps (pipelining; dual-TC sharding on v7x); never below
    # one packed row-group per step and never above the VMEM tile budget.
    target_steps = min(rows // min_rows, 4)
    tr = -(-rows // target_steps)
    tr = max(min_rows, (tr // min_rows) * min_rows)
    return min(tr, budget)


@functools.partial(jax.jit, static_argnames=("stride", "strict", "block_bytes"))
def zero_forward(x, stride: int, *, strict: bool = True, block_bytes=None):
    """Forward pass of `Zero`. x is NCHW.

    strict=True : exact torch semantics (reads x: NaN/Inf -> NaN, signed zeros kept).
    strict=False: fast path returning zeros without reading x (half the HBM
                  traffic; often fused away) for callers that don't need NaN
                  propagation.
    """
    if stride != 1:
        # Matches x[:, :, ::stride, ::stride] (ceil-length slicing, like PyTorch).
        # TODO(synk): verify this slice + reshape fuses into the pallas operand via
        # allow_input_fusion; if it materializes an HBM intermediate, move the H
        # subsample into the index_map and the W subsample in-kernel.
        x = x[:, :, ::stride, ::stride]

    out_shape_nd = x.shape
    dtype = x.dtype

    if not strict:
        return jnp.zeros(out_shape_nd, dtype)

    total = x.size
    itemsize = jnp.dtype(dtype).itemsize
    min_rows = _packed_rows(itemsize)
    if block_bytes is None:
        block_bytes = _default_block_bytes()

    flat = x.reshape(-1)
    padded = total
    if total % 128 != 0:
        # Lane-dense fallback: pad up to a full packed tile so every store is a
        # full 128-lane vst.  Zero padding is semantically safe (0 * 0 == 0) and
        # the pad region is sliced off below.
        group = min_rows * 128
        pad = (-total) % group
        flat = jnp.pad(flat, (0, pad))
        padded = total + pad

    lane_cap = max(128, min(8192, block_bytes // (min_rows * itemsize)))
    lanes = _pick_lanes(padded, lane_cap, min_rows)
    if lanes is None:  # only possible for tiny tensors with no 128-divisor
        lanes = padded
    rows = padded // lanes
    tile_rows = _pick_tile_rows(rows, lanes, itemsize, min_rows, block_bytes)

    x2 = flat.reshape(rows, lanes)  # contiguous reshape of the flat view
    grid = (pl.cdiv(rows, tile_rows),)

    tile_bytes = tile_rows * lanes * itemsize
    cp_kwargs = dict(dimension_semantics=("parallel",), allow_input_fusion=[True])
    # 2 operands x 2 pipeline buffers; only raise the scoped-VMEM limit above
    # the default when the double-buffered tiles actually need it (v5e default
    # is 16 MiB).  32 MiB stays within v7x's 64 MiB physical VMEM.
    if 4 * tile_bytes + (2 << 20) > (16 << 20):
        cp_kwargs["vmem_limit_bytes"] = 32 * 1024 * 1024

    out2 = pl.pallas_call(
        _zero_kernel,
        out_shape=jax.ShapeDtypeStruct((rows, lanes), dtype),
        grid=grid,
        in_specs=[pl.BlockSpec((tile_rows, lanes), lambda i: (i, 0))],
        out_specs=pl.BlockSpec((tile_rows, lanes), lambda i: (i, 0)),
        compiler_params=pltpu.CompilerParams(**cp_kwargs),
        cost_estimate=pl.CostEstimate(
            flops=padded,
            transcendentals=0,
            bytes_accessed=2 * padded * itemsize,
        ),
        # NOTE: callers that donate x could add input_output_aliases={0: 0} to
        # halve peak HBM footprint (traffic unchanged).
    )(x2)

    out_flat = out2.reshape(-1)
    if padded != total:
        out_flat = out_flat[:total]
    return out_flat.reshape(out_shape_nd)


if __name__ == "__main__":
    key = jax.random.PRNGKey(0)
    x = jax.random.normal(key, (2, 4, 16, 16), dtype=jnp.float32)

    # stride = 1
    y1 = jax.block_until_ready(zero_forward(x, stride=1))
    assert y1.shape == x.shape and y1.dtype == x.dtype
    assert jnp.allclose(y1, x * 0.0)

    # stride = 2
    y2 = jax.block_until_ready(zero_forward(x, stride=2))
    assert y2.shape == (2, 4, 8, 8) and y2.dtype == x.dtype
    assert jnp.allclose(y2, x[:, :, ::2, ::2] * 0.0)

    # NaN/Inf propagation matches torch.mul(0.0): NaN/Inf -> NaN.
    x_nan = x.at[0, 0, 0, 0].set(jnp.nan).at[1, 2, 3, 4].set(jnp.inf)
    y3 = jax.block_until_ready(zero_forward(x_nan, stride=1))
    assert jnp.allclose(y3, x_nan * 0.0, equal_nan=True)
    assert bool(jnp.isnan(y3[0, 0, 0, 0])) and bool(jnp.isnan(y3[1, 2, 3, 4]))

    # bf16 exercises the (16,128) packed-tile path.
    x_bf = x.astype(jnp.bfloat16)
    y_bf = jax.block_until_ready(zero_forward(x_bf, stride=1))
    assert y_bf.dtype == jnp.bfloat16 and y_bf.shape == x.shape
    assert jnp.allclose(y_bf.astype(jnp.float32), 0.0)

    # Lane-dense padded fallback: element count not a multiple of 128.
    x_odd = jax.random.normal(key, (1, 3, 5, 16), dtype=jnp.float32)
    y4 = jax.block_until_ready(zero_forward(x_odd, stride=1))
    assert y4.shape == x_odd.shape and jnp.allclose(y4, x_odd * 0.0)

    # Multi-block tiled path (small block_bytes forces grid > 1).
    x_big = jax.random.normal(key, (2, 4, 32, 128), dtype=jnp.float32)
    y5 = jax.block_until_ready(zero_forward(x_big, stride=1, block_bytes=8192))
    assert jnp.allclose(y5, x_big * 0.0)
    y6 = jax.block_until_ready(zero_forward(x_big, stride=2, block_bytes=8192))
    assert jnp.allclose(y6, x_big[:, :, ::2, ::2] * 0.0)

    # Fast path (no read of x) for callers that don't need NaN propagation.
    y7 = jax.block_until_ready(zero_forward(x_nan, stride=1, strict=False))
    assert y7.shape == x.shape and bool(jnp.all(y7 == 0))

    print("KERNEL_OK")
</pallas_src>

<mosaic_0001>
module attributes {stable_mosaic.version = 11 : i64} {
  func.func @_zero_kernel(%arg0: i32, %arg1: memref<8x128xf32, #tpu.memory_space<vmem>>, %arg2: memref<8x128xf32, #tpu.memory_space<vmem>>) attributes {dimension_semantics = [#tpu.dimension_semantics<parallel>], iteration_bounds = array<i64: 2>, scalar_prefetch = 0 : i64, scratch_operands = 0 : i64, tpu.core_type = #tpu.core_type<tc>, window_params = [{transform_indices = @transform_0, window_bounds = array<i64: 8, 128>}, {transform_indices = @transform_1, window_bounds = array<i64: 8, 128>}]} {
    %c0 = arith.constant 0 : index
    %c0_0 = arith.constant 0 : index
    %0 = vector.load %arg1[%c0, %c0_0] : memref<8x128xf32, #tpu.memory_space<vmem>>, vector<8x128xf32>
    %cst = arith.constant 0.000000e+00 : f32
    %1 = vector.broadcast %cst : f32 to vector<8x128xf32>
    %2 = arith.mulf %0, %1 : vector<8x128xf32>
    %c0_1 = arith.constant 0 : index
    %c0_2 = arith.constant 0 : index
    %3 = vector.load %arg2[%c0_1, %c0_2] : memref<8x128xf32, #tpu.memory_space<vmem>>, vector<8x128xf32>
    tpu.vector_store %arg2[%c0_1, %c0_2], %2 {strides = array<i32>} : memref<8x128xf32, #tpu.memory_space<vmem>>, vector<8x128xf32>,
    return
  }
  func.func @transform_0(%arg0: i32) -> (i32, i32) {
    %c0_i32 = arith.constant 0 : i32
    %c0_i32_0 = arith.constant 0 : i32
    return %arg0, %c0_i32 : i32, i32
  }
  func.func @transform_1(%arg0: i32) -> (i32, i32) {
    %c0_i32 = arith.constant 0 : i32
    %c0_i32_0 = arith.constant 0 : i32
    return %arg0, %c0_i32 : i32, i32
  }
}

</mosaic_0001>

<llo_original>
// kernel: zero_forward.1
$region0: #{zero_forward.1}
  #allocation0 [shape = 'u32[]', space=smem, size = 0x4, offset = 0x4, fixed_abs, tag = 'smem constant byte address 0x4 - core index']
  #allocation1 [shape = 'u32[144,128]{1,0:T(1,128)}', space=vmem, size = 0x12000, scoped, tag = 'internal scratch']
  %s0 = inlined_call_operand.vmem [shape: f32[16,128], index: 0, kind: input, shape index: {}]
  %s1 = inlined_call_operand.vmem [shape: f32[16,128], index: 1, kind: output, shape index: {}]
  %s2 = sld [smem:[#allocation0]]
  $region37: #{zero_forward.1} parent=0
    _
  %s4 = ssub.s32 1, %s2
  %s5 = scalar_select 0, %s4, %s2
  loop: start=0, step=1, limit=4
  $region2: #{zero_forward.1} parent=0 // loop_pre_header
    _
  $region3: #{zero_forward.1} parent=0 // loop_header
    %s7 = sphi 0, %s11
    %p8 = scmp.ge.s32.totalorder %s7, 4
    %s17 = sphi 0, %s19
    %s20 = sphi 0, %s17
    %s21 = sphi 0, %s20
    %s37 = sphi 0, %s21
    %s43 = sphi 0, %s45
    %s46 = sphi 0, %s43
    %s47 = sphi 0, %s46
    %s63 = sphi 0, %s47
  $region4: #{zero_forward.1} parent=0 // loop_header_branch
    %10 = sbr.rel (%p8) target = $region8
  $region5: #{zero_forward.1} parent=0 // loop_body
    %s12 = ssub.s32 %s7, 1
    %s13 = ssub.s32 %s7, 2
    %s14 = sadd.s32 %s7, 1
    %s15 = ssub.s32 %s7, %s14
    %p16 = scmp.eq.s32.totalorder %s15, 0
    %s18 = sadd.s32 %s17, 1
    %s19 = scalar_select %p16, %s17, %s18
    %p22 = pneg %p16
    %p23 = scmp.eq.s32.totalorder %s7, 1
    %p24 = por %p22, %p23
    %p25 = scmp.ne.s32.totalorder %s17, %s20
    %p26 = scmp.eq.s32.totalorder %s7, 0
    %p27 = por %p25, %p26
    %p28 = scmp.ne.s32.totalorder %s17, %s20
    %p29 = scmp.eq.s32.totalorder %s12, 1
    %p30 = por %p28, %p29
    %p31 = scmp.ne.s32.totalorder %s20, %s21
    %p32 = scmp.eq.s32.totalorder %s12, 0
    %p33 = por %p31, %p32
    %p34 = scmp.ne.s32.totalorder %s20, %s21
    %p35 = scmp.eq.s32.totalorder %s13, 1
    %p36 = por %p34, %p35
    %p38 = scmp.ne.s32.totalorder %s21, %s37
    %p39 = scmp.eq.s32.totalorder %s13, 0
    %p40 = por %p38, %p39
    %s41 = ssub.s32 %s7, %s14
    %p42 = scmp.eq.s32.totalorder %s41, 0
    %s44 = sadd.s32 %s43, 1
    %s45 = scalar_select %p42, %s43, %s44
    %p48 = pneg %p42
    %p49 = scmp.eq.s32.totalorder %s7, 1
    %p50 = por %p48, %p49
    %p51 = scmp.ne.s32.totalorder %s43, %s46
    %p52 = scmp.eq.s32.totalorder %s7, 0
    %p53 = por %p51, %p52
    %p54 = scmp.ne.s32.totalorder %s43, %s46
    %p55 = scmp.eq.s32.totalorder %s12, 1
    %p56 = por %p54, %p55
    %p57 = scmp.ne.s32.totalorder %s46, %s47
    %p58 = scmp.eq.s32.totalorder %s12, 0
    %p59 = por %p57, %p58
    %p60 = scmp.ne.s32.totalorder %s46, %s47
    %p61 = scmp.eq.s32.totalorder %s13, 1
    %p62 = por %p60, %p61
    %p64 = scmp.ne.s32.totalorder %s47, %s63
    %p65 = scmp.eq.s32.totalorder %s13, 0
    %p66 = por %p64, %p65
    %p67 = scmp.le.s32.totalorder 1, %s7
    %p68 = scmp.lt.s32.totalorder %s7, 3
    %p69 = pnand %p67, %p68
    %p70 = pneg %p69
    // Predicated region
    $region9: #{zero_forward.1} parent=5 // pred_check
      _
    $region10: #{zero_forward.1} parent=5 // pred_check_branch
      %72 = sbr.rel (%p69) target = $region12
    $region11: #{zero_forward.1} parent=5 // pred_region
      %s73 = ssub.s32 %s7, 1
    $region12: #{zero_forward.1} parent=5 // pred_fallthru
      _
    %p74 = scmp.lt.s32.totalorder %s7, 2
    // Predicated region
    $region13: #{zero_forward.1} parent=5 // pred_check
      %p75 = pneg %p74
    $region14: #{zero_forward.1} parent=5 // pred_check_branch
      %77 = sbr.rel (%p75) target = $region16
    $region15: #{zero_forward.1} parent=5 // pred_region
      // Predicated region
      $region17: #{zero_forward.1} parent=15 // pred_check
        %p78 = pneg %p27
      $region18: #{zero_forward.1} parent=15 // pred_check_branch
        %80 = sbr.rel (%p78) target = $region20
      $region19: #{zero_forward.1} parent=15 // pred_region
        %p81 = scmp.lt.s32.totalorder %s7, 1
        %s82 = scalar_select %p81, %s7, 1
        %s83 = smul.addr %s82, 8
        %s84 = scalar_lea.vmem %s0, %s83
      $region20: #{zero_forward.1} parent=15 // pred_fallthru
        _
    $region16: #{zero_forward.1} parent=5 // pred_fallthru
      _
    %p85 = scmp.le.s32.totalorder 1, %s7
    %p86 = scmp.lt.s32.totalorder %s7, 3
    %p87 = pnand %p85, %p86
    %p88 = pneg %p87
    // Predicated region
    $region21: #{zero_forward.1} parent=5 // pred_check
      _
    $region22: #{zero_forward.1} parent=5 // pred_check_branch
      %90 = sbr.rel (%p87) target = $region24
    $region23: #{zero_forward.1} parent=5 // pred_region
      %s91 = ssub.s32 %s7, 1
      %p92 = scmp.lt.s32.totalorder %s12, 1
      %s93 = scalar_select %p92, %s12, 1
      %s94 = smul.addr %s93, 8
      %s95 = scalar_lea.vmem %s0, %s94
      %p96 = pneg %p33
      %p97 = pneg %p30
      %p98 = pneg %p59
      %p99 = pneg %p56
      %p100 = scmp.lt.s32.totalorder %s12, 1
      %s101 = scalar_select %p100, %s12, 1
      %s102 = smul.addr %s101, 8
      %s103 = scalar_lea.vmem %s1, %s102
      %p104 = scmp.lt.s32.totalorder %s12, 1
      %s105 = scalar_select %p104, %s12, 1
      %s106 = smul.addr %s105, 8
      %s107 = scalar_lea.vmem %s0, %s106
      %p108 = scmp.lt.s32.totalorder %s12, 1
      %s109 = scalar_select %p108, %s12, 1
      %s110 = smul.addr %s109, 8
      %s111 = scalar_lea.vmem %s1, %s110
      %v112 = vld [vmem:[%s107] sm:$0xff]
      %v113 = vmul.f32 %v112, 0.0
      %114 = vst [vmem:[%s111] sm:$0xff] %v113
      %p115 = scmp.lt.s32.totalorder %s12, 1
      %s116 = scalar_select %p115, %s12, 1
      %s117 = smul.addr %s116, 8
      %s118 = scalar_lea.vmem %s1, %s117
      // Predicated region
      $region25: #{zero_forward.1} parent=23 // pred_check
        %p119 = pneg %p56
      $region26: #{zero_forward.1} parent=23 // pred_check_branch
        %121 = sbr.rel (%p119) target = $region28
      $region27: #{zero_forward.1} parent=23 // pred_region
        _
      $region28: #{zero_forward.1} parent=23 // pred_fallthru
        _
    $region24: #{zero_forward.1} parent=5 // pred_fallthru
      _
    %p122 = scmp.le.s32.totalorder 2, %s7
    // Predicated region
    $region29: #{zero_forward.1} parent=5 // pred_check
      %p123 = pneg %p122
    $region30: #{zero_forward.1} parent=5 // pred_check_branch
      %125 = sbr.rel (%p123) target = $region32
    $region31: #{zero_forward.1} parent=5 // pred_region
      %s126 = ssub.s32 %s7, 2
      // Predicated region
      $region33: #{zero_forward.1} parent=31 // pred_check
        %p127 = pneg %p62
      $region34: #{zero_forward.1} parent=31 // pred_check_branch
        %129 = sbr.rel (%p127) target = $region36
      $region35: #{zero_forward.1} parent=31 // pred_region
        %p130 = scmp.lt.s32.totalorder %s13, 1
        %s131 = scalar_select %p130, %s13, 1
        %s132 = smul.addr %s131, 8
        %s133 = scalar_lea.vmem %s1, %s132
      $region36: #{zero_forward.1} parent=31 // pred_fallthru
        _
    $region32: #{zero_forward.1} parent=5 // pred_fallthru
      _
  $region6: #{zero_forward.1} parent=0 // loop_footer
    %s11 = sadd.s32 1, %s7
  $region7: #{zero_forward.1} parent=0 // loop_footer_branch
    %6 = sbr.rel target = $region3
  $region8: #{zero_forward.1} parent=0 // loop_exit
    _

</llo_original>
